<compile_context>
chip_gen: v7x
topology: tpu7x:2x2x1
jax: 0.10.0
libtpu: 0.0.40
codegen_flags: <defaults>
</compile_context>

<pallas_src>
import math
import functools

import jax
import jax.numpy as jnp
import numpy as np
from jax.experimental import pallas as pl
from jax.experimental.pallas import tpu as pltpu

_VMEM_LIMIT = 48 * 1024 * 1024  # explicit scoped-VMEM cap; safe on v5e/v6e/v7x


def _pick_tile(dim, preferred, align):
    """Largest tile <= preferred that divides dim and is a multiple of align;
    falls back to the full dim (always a legal BlockSpec block).
    TODO(synk): for awkward (prime-ish) dims the fallback is one giant block;
    callers should pad such dims before calling."""
    if dim <= preferred:
        return dim
    t = (preferred // align) * align
    while t >= align:
        if dim % t == 0:
            return t
        t -= align
    return dim


# ----------------------------------------------------------------------------
# Tiled linear projection kernel: y = x @ W + b  (W already (IN, OUT))
# ----------------------------------------------------------------------------
def _linear_kernel(x_ref, w_ref, b_ref, o_ref, acc_ref):
    @pl.when(pl.program_id(2) == 0)
    def _init():
        acc_ref[...] = jnp.zeros_like(acc_ref)

    acc_ref[...] += jnp.dot(x_ref[...], w_ref[...],
                            preferred_element_type=jnp.float32)

    @pl.when(pl.program_id(2) == pl.num_programs(2) - 1)
    def _finalize():
        o_ref[...] = (acc_ref[...] + b_ref[...].astype(jnp.float32)).astype(o_ref.dtype)


def pallas_linear(x, w_t, b, *, tm=512, tn=512, tk=512):
    """x: (N, IN); w_t: (IN, OUT) pre-transposed; b: (OUT,) -> (N, OUT)."""
    n, in_dim = x.shape
    out_dim = w_t.shape[1]
    b2 = b.reshape(1, out_dim)

    tm = _pick_tile(n, tm, 8)
    tn = _pick_tile(out_dim, tn, 128)
    tk = _pick_tile(in_dim, tk, 128)
    grid = (n // tm, out_dim // tn, in_dim // tk)

    return pl.pallas_call(
        _linear_kernel,
        out_shape=jax.ShapeDtypeStruct((n, out_dim), x.dtype),
        grid=grid,
        in_specs=[
            pl.BlockSpec((tm, tk), lambda i, j, k: (i, k)),
            pl.BlockSpec((tk, tn), lambda i, j, k: (k, j)),
            pl.BlockSpec((1, tn), lambda i, j, k: (0, j)),
        ],
        out_specs=pl.BlockSpec((tm, tn), lambda i, j, k: (i, j)),
        scratch_shapes=[pltpu.VMEM((tm, tn), jnp.float32)],
        compiler_params=pltpu.CompilerParams(
            dimension_semantics=("parallel", "parallel", "arbitrary"),
            vmem_limit_bytes=_VMEM_LIMIT),
    )(x, w_t, b2)


# ----------------------------------------------------------------------------
# Flash-style attention kernel.
# grid = (batch, q_tiles, kv_tiles); kv is innermost + "arbitrary".
# q block (1, tq, E), k/v blocks (1, tkv, GD), output block (1, tq, E)
# (resident across the kv axis -> dense HBM writeback once per q-tile).
# Running per-head stats (m, l) and the lane-packed accumulator live in
# VMEM scratch.  The module's all-ones additive mask is a softmax no-op.
# ----------------------------------------------------------------------------
def _flash_attn_kernel(q_ref, k_ref, v_ref, o_ref, m_ref, l_ref, acc_ref,
                       *, H, G, D, scale, matmul_dtype):
    kv = pl.program_id(2)

    @pl.when(kv == 0)
    def _init():
        m_ref[...] = jnp.full_like(m_ref, -jnp.inf)
        l_ref[...] = jnp.zeros_like(l_ref)
        acc_ref[...] = jnp.zeros_like(acc_ref)

    R = H // G                              # query heads per KV group
    qs = q_ref[0] * scale                   # fold 1/sqrt(D) into q (tq*E mults)
    kb = k_ref[0]
    vb = v_ref[0]
    if matmul_dtype is not None:            # optional bf16 MXU operands
        qs = qs.astype(matmul_dtype)
        kb = kb.astype(matmul_dtype)
        vb = vb.astype(matmul_dtype)
    dn_qk = (((1,), (1,)), ((), ()))        # contract last dims: q @ k^T

    for g in range(G):                      # K/V slices hoisted out of head loop
        kh = kb[:, g * D:(g + 1) * D]       # (tkv, D)
        vh = vb[:, g * D:(g + 1) * D]       # (tkv, D)
        for r in range(R):
            h = g * R + r
            qh = qs[:, h * D:(h + 1) * D]   # (tq, D)

            s = jax.lax.dot_general(qh, kh, dn_qk,
                                    preferred_element_type=jnp.float32)
            m_prev = m_ref[:, h:h + 1]
            m_new = jnp.maximum(m_prev, jnp.max(s, axis=-1, keepdims=True))
            alpha = jnp.exp(m_prev - m_new)
            p = jnp.exp(s - m_new)
            l_ref[:, h:h + 1] = alpha * l_ref[:, h:h + 1] + jnp.sum(p, axis=-1,
                                                                    keepdims=True)
            pv = jnp.dot(p.astype(vh.dtype), vh,
                         preferred_element_type=jnp.float32)
            acc_ref[:, h * D:(h + 1) * D] = (alpha * acc_ref[:, h * D:(h + 1) * D]
                                             + pv)
            m_ref[:, h:h + 1] = m_new

    @pl.when(kv == pl.num_programs(2) - 1)
    def _finalize():
        for h in range(H):
            inv = pl.reciprocal(l_ref[:, h:h + 1], approx=True)   # EUP slot
            o_ref[0, :, h * D:(h + 1) * D] = (
                acc_ref[:, h * D:(h + 1) * D] * inv).astype(o_ref.dtype)


def _attention_call(arrays, in_specs, B, S, E, GD, H, G, tq, tkv,
                    out_dtype, matmul_dtype):
    D = E // H
    kern = functools.partial(_flash_attn_kernel, H=H, G=G, D=D,
                             scale=1.0 / math.sqrt(D), matmul_dtype=matmul_dtype)
    return pl.pallas_call(
        kern,
        out_shape=jax.ShapeDtypeStruct((B, S, E), out_dtype),
        grid=(B, S // tq, S // tkv),
        in_specs=in_specs,
        out_specs=pl.BlockSpec((1, tq, E), lambda b, qi, kv: (b, qi, 0)),
        scratch_shapes=[
            pltpu.VMEM((tq, H), jnp.float32),   # running row-max per head
            pltpu.VMEM((tq, H), jnp.float32),   # running row-sum per head
            pltpu.VMEM((tq, E), jnp.float32),   # lane-packed accumulator
        ],
        compiler_params=pltpu.CompilerParams(
            dimension_semantics=("parallel", "parallel", "arbitrary"),
            vmem_limit_bytes=_VMEM_LIMIT),
    )(*arrays)


def pallas_attention(q, k, v, H, G, *, tq=256, tkv=512, matmul_dtype=None):
    """q: (B, S, H*D); k, v: (B, S, G*D) -> (B, S, H*D) lane-dense."""
    B, S, E = q.shape
    GD = k.shape[-1]
    tq = _pick_tile(S, tq, 8)
    tkv = _pick_tile(S, tkv, 8)
    in_specs = [
        pl.BlockSpec((1, tq, E), lambda b, qi, kv: (b, qi, 0)),
        pl.BlockSpec((1, tkv, GD), lambda b, qi, kv: (b, kv, 0)),
        pl.BlockSpec((1, tkv, GD), lambda b, qi, kv: (b, kv, 0)),
    ]
    return _attention_call((q, k, v), in_specs, B, S, E, GD, H, G, tq, tkv,
                           q.dtype, matmul_dtype)


def pallas_attention_packed(qkv, *, E, GD, H, G, tq=256, tkv=512,
                            matmul_dtype=None):
    """qkv: (B, S, E+2*GD) packed [q | k | v] columns (fused projection output)."""
    B, S, _ = qkv.shape
    tq = _pick_tile(S, tq, 8)
    tkv = _pick_tile(S, tkv, 8)
    kcol = E // GD                          # column block offsets of k and v
    in_specs = [
        pl.BlockSpec((1, tq, E), lambda b, qi, kv: (b, qi, 0)),
        pl.BlockSpec((1, tkv, GD), lambda b, qi, kv: (b, kv, kcol)),
        pl.BlockSpec((1, tkv, GD), lambda b, qi, kv: (b, kv, kcol + 1)),
    ]
    return _attention_call((qkv, qkv, qkv), in_specs, B, S, E, GD, H, G, tq, tkv,
                           qkv.dtype, matmul_dtype)


# ----------------------------------------------------------------------------
# Parameters (torch nn.Linear layout) + one-time preparation (transpose/concat)
# ----------------------------------------------------------------------------
def init_params(key, embed_dim, num_query_heads, num_groups=None,
                dtype=jnp.float32):
    if num_groups is None:
        num_groups = num_query_heads
    head_dim = embed_dim // num_query_heads
    kv_dim = num_groups * head_dim
    ks = jax.random.split(key, 8)
    scale = 0.02
    def rn(k, shape):
        return (jax.random.normal(k, shape, jnp.float32) * scale).astype(dtype)
    return {
        "q_w": rn(ks[0], (embed_dim, embed_dim)), "q_b": rn(ks[1], (embed_dim,)),
        "k_w": rn(ks[2], (kv_dim, embed_dim)),    "k_b": rn(ks[3], (kv_dim,)),
        "v_w": rn(ks[4], (kv_dim, embed_dim)),    "v_b": rn(ks[5], (kv_dim,)),
        "o_w": rn(ks[6], (embed_dim, embed_dim)), "o_b": rn(ks[7], (embed_dim,)),
    }


def prepare_params(params):
    """One-time weight relayout: transpose to (IN, OUT) and pre-concatenate
    the fused QKV projection, so no per-step HBM transpose/concat traffic."""
    qkv_w = jnp.concatenate([params["q_w"], params["k_w"], params["v_w"]], axis=0)
    qkv_b = jnp.concatenate([params["q_b"], params["k_b"], params["v_b"]], axis=0)
    return {
        "q_wt": params["q_w"].T, "q_b": params["q_b"],
        "k_wt": params["k_w"].T, "k_b": params["k_b"],
        "v_wt": params["v_w"].T, "v_b": params["v_b"],
        "o_wt": params["o_w"].T, "o_b": params["o_b"],
        "qkv_wt": qkv_w.T, "qkv_b": qkv_b,
    }


# ----------------------------------------------------------------------------
# BidirectionalAttention forward
# ----------------------------------------------------------------------------
def bidirectional_attention(prep, query, key, value, mask, num_query_heads,
                            num_groups=None, *, tq=256, tkv=512,
                            matmul_dtype=None):
    """query/key/value: (B, S, E).  mask is replaced by ones (additive no-op)."""
    del mask  # torch.ones_like(mask) -> constant additive mask, a softmax no-op
    B, S, E = query.shape
    H = num_query_heads
    G = H if num_groups is None else num_groups
    D = E // H
    GD = G * D

    fused = (query is key) and (key is value)
    # Packed direct-feed needs 128-aligned q/k/v column widths for legal blocks.
    packed_ok = (fused and E % 128 == 0 and GD % 128 == 0
                 and E % GD == 0 and (E + 2 * GD) % E == 0)

    if fused:
        # Self-attention fast path: single matmul reads the activation once.
        qkv = pallas_linear(query.reshape(B * S, E), prep["qkv_wt"], prep["qkv_b"])
        if packed_ok:
            qkv3 = qkv.reshape(B, S, E + 2 * GD)
            out = pallas_attention_packed(qkv3, E=E, GD=GD, H=H, G=G,
                                          tq=tq, tkv=tkv, matmul_dtype=matmul_dtype)
        else:
            q = qkv[:, :E].reshape(B, S, E)
            k = qkv[:, E:E + GD].reshape(B, S, GD)
            v = qkv[:, E + GD:].reshape(B, S, GD)
            out = pallas_attention(q, k, v, H, G, tq=tq, tkv=tkv,
                                   matmul_dtype=matmul_dtype)
    else:
        q = pallas_linear(query.reshape(B * S, E), prep["q_wt"], prep["q_b"]).reshape(B, S, E)
        k = pallas_linear(key.reshape(B * S, E), prep["k_wt"], prep["k_b"]).reshape(B, S, GD)
        v = pallas_linear(value.reshape(B * S, E), prep["v_wt"], prep["v_b"]).reshape(B, S, GD)
        out = pallas_attention(q, k, v, H, G, tq=tq, tkv=tkv,
                               matmul_dtype=matmul_dtype)

    out = pallas_linear(out.reshape(B * S, E), prep["o_wt"], prep["o_b"])
    return out.reshape(B, S, E)


# ----------------------------------------------------------------------------
# Pure-JAX reference (follows the PyTorch module exactly, f32 math).
# ----------------------------------------------------------------------------
def reference(params, query, key, value, num_query_heads, num_groups):
    B, S, E = query.shape
    H, G = num_query_heads, num_groups
    D = E // H
    f = lambda a: a.astype(jnp.float32)
    q = f(query).reshape(B * S, E) @ f(params["q_w"]).T + f(params["q_b"])
    k = f(key).reshape(B * S, E) @ f(params["k_w"]).T + f(params["k_b"])
    v = f(value).reshape(B * S, E) @ f(params["v_w"]).T + f(params["v_b"])
    q = q.reshape(B, S, H, D).transpose(0, 2, 1, 3)
    k = k.reshape(B, S, G, D).transpose(0, 2, 1, 3)
    v = v.reshape(B, S, G, D).transpose(0, 2, 1, 3)
    if G != H:
        k = jnp.repeat(k, H // G, axis=1)   # repeat_interleave semantics
        v = jnp.repeat(v, H // G, axis=1)
    s = jnp.einsum("bhqd,bhkd->bhqk", q, k) / math.sqrt(D) + 1.0  # ones mask
    p = jax.nn.softmax(s, axis=-1)
    o = jnp.einsum("bhqk,bhkd->bhqd", p, v)
    o = o.transpose(0, 2, 1, 3).reshape(B * S, E)
    o = o @ f(params["o_w"]).T + f(params["o_b"])
    return o.reshape(B, S, E)


if __name__ == "__main__":
    root = jax.random.PRNGKey(0)
    k1, k2, k3, k4, kp1, kp2, kp3 = jax.random.split(root, 7)

    # --- Case 1: tiny, non-128-aligned shapes; cross-attention MHA (f32) -----
    B, S, E, H = 2, 8, 32, 4
    q_in = jax.random.normal(k1, (B, S, E), jnp.float32)
    k_in = jax.random.normal(k2, (B, S, E), jnp.float32)
    v_in = jax.random.normal(k3, (B, S, E), jnp.float32)
    mask = jnp.zeros((B, S, S), jnp.float32)       # ignored (module uses ones)
    params = init_params(kp1, E, H)
    prep = prepare_params(params)
    out = jax.block_until_ready(
        bidirectional_attention(prep, q_in, k_in, v_in, mask, H))
    ref = reference(params, q_in, k_in, v_in, H, H)
    np.testing.assert_allclose(np.asarray(out), np.asarray(ref),
                               rtol=5e-3, atol=5e-3)

    # --- Case 2: 128-aligned self-attention (fused QKV + packed direct feed) -
    B, S, E, H = 2, 128, 256, 4
    x = jax.random.normal(k4, (B, S, E), jnp.float32)
    mask2 = jnp.zeros((B, S, S), jnp.float32)
    params2 = init_params(kp2, E, H)
    prep2 = prepare_params(params2)
    out2 = jax.block_until_ready(
        bidirectional_attention(prep2, x, x, x, mask2, H))
    ref2 = reference(params2, x, x, x, H, H)
    np.testing.assert_allclose(np.asarray(out2), np.asarray(ref2),
                               rtol=5e-3, atol=5e-3)

    # --- Case 3: GQA (G=2), cross-attention, 128-aligned (f32) ---------------
    G = 2
    params3 = init_params(kp3, E, H, num_groups=G)
    prep3 = prepare_params(params3)
    q3 = jax.random.normal(jax.random.fold_in(root, 10), (B, S, E), jnp.float32)
    k3_ = jax.random.normal(jax.random.fold_in(root, 11), (B, S, E), jnp.float32)
    v3 = jax.random.normal(jax.random.fold_in(root, 12), (B, S, E), jnp.float32)
    out3 = jax.block_until_ready(
        bidirectional_attention(prep3, q3, k3_, v3, mask2, H, num_groups=G))
    ref3 = reference(params3, q3, k3_, v3, H, G)
    np.testing.assert_allclose(np.asarray(out3), np.asarray(ref3),
                               rtol=5e-3, atol=5e-3)

    # --- Case 4: bf16 self-attention (bf16 MXU operands, f32 accumulation) ---
    params4 = init_params(kp2, E, H, dtype=jnp.bfloat16)
    prep4 = prepare_params(params4)
    x_bf = x.astype(jnp.bfloat16)
    out4 = jax.block_until_ready(
        bidirectional_attention(prep4, x_bf, x_bf, x_bf, mask2, H))
    ref4 = reference(params4, x_bf, x_bf, x_bf, H, H)
    np.testing.assert_allclose(np.asarray(out4, dtype=np.float32),
                               np.asarray(ref4), rtol=2e-2, atol=2e-2)

    print("KERNEL_OK")
</pallas_src>

<mosaic_0001>
module attributes {stable_mosaic.version = 11 : i64} {
  func.func @_linear_kernel(%arg0: i32, %arg1: i32, %arg2: i32, %arg3: memref<16x32xf32, #tpu.memory_space<vmem>>, %arg4: memref<32x32xf32, #tpu.memory_space<vmem>>, %arg5: memref<1x32xf32, #tpu.memory_space<vmem>>, %arg6: memref<16x32xf32, #tpu.memory_space<vmem>>, %arg7: memref<16x32xf32, #tpu.memory_space<vmem>>) attributes {dimension_semantics = [#tpu.dimension_semantics<parallel>, #tpu.dimension_semantics<parallel>, #tpu.dimension_semantics<arbitrary>], iteration_bounds = array<i64: 1, 1, 1>, scalar_prefetch = 0 : i64, scratch_operands = 1 : i64, tpu.core_type = #tpu.core_type<tc>, window_params = [{transform_indices = @transform_0, window_bounds = array<i64: 16, 32>}, {transform_indices = @transform_1, window_bounds = array<i64: 32, 32>}, {transform_indices = @transform_2, window_bounds = array<i64: 1, 32>}, {transform_indices = @transform_3, window_bounds = array<i64: 16, 32>}]} {
    %c0_i32 = arith.constant 0 : i32
    %0 = arith.cmpi eq, %arg2, %c0_i32 : i32
    %1 = arith.extui %0 : i1 to i32
    %c0_i32_0 = arith.constant 0 : i32
    %2 = arith.cmpi ne, %1, %c0_i32_0 : i32
    scf.if %2 {
      %cst_10 = arith.constant 0.000000e+00 : f32
      %12 = vector.broadcast %cst_10 : f32 to vector<16x32xf32>
      %c0_11 = arith.constant 0 : index
      %c0_12 = arith.constant 0 : index
      %13 = vector.load %arg7[%c0_11, %c0_12] : memref<16x32xf32, #tpu.memory_space<vmem>>, vector<16x32xf32>
      tpu.vector_store %arg7[%c0_11, %c0_12], %12 {strides = array<i32>} : memref<16x32xf32, #tpu.memory_space<vmem>>, vector<16x32xf32>,
    } else {
    }
    %c0 = arith.constant 0 : index
    %c0_1 = arith.constant 0 : index
    %3 = vector.load %arg7[%c0, %c0_1] : memref<16x32xf32, #tpu.memory_space<vmem>>, vector<16x32xf32>
    %c0_2 = arith.constant 0 : index
    %c0_3 = arith.constant 0 : index
    %4 = vector.load %arg3[%c0_2, %c0_3] : memref<16x32xf32, #tpu.memory_space<vmem>>, vector<16x32xf32>
    %c0_4 = arith.constant 0 : index
    %c0_5 = arith.constant 0 : index
    %5 = vector.load %arg4[%c0_4, %c0_5] : memref<32x32xf32, #tpu.memory_space<vmem>>, vector<32x32xf32>
    %cst = arith.constant dense<0.000000e+00> : vector<16x32xf32>
    %6 = tpu.matmul %4, %5, %cst {dimension_numbers = #tpu.dot_dimension_numbers<[1], [0], [0], [1], [0, 0, 1, 1], [], []>} : vector<16x32xf32>, vector<32x32xf32>, vector<16x32xf32> -> vector<16x32xf32>
    %7 = arith.addf %3, %6 : vector<16x32xf32>
    %c0_6 = arith.constant 0 : index
    %c0_7 = arith.constant 0 : index
    %8 = vector.load %arg7[%c0_6, %c0_7] : memref<16x32xf32, #tpu.memory_space<vmem>>, vector<16x32xf32>
    tpu.vector_store %arg7[%c0_6, %c0_7], %7 {strides = array<i32>} : memref<16x32xf32, #tpu.memory_space<vmem>>, vector<16x32xf32>,
    %c0_i32_8 = arith.constant 0 : i32
    %9 = arith.cmpi eq, %arg2, %c0_i32_8 : i32
    %10 = arith.extui %9 : i1 to i32
    %c0_i32_9 = arith.constant 0 : i32
    %11 = arith.cmpi ne, %10, %c0_i32_9 : i32
    scf.if %11 {
      %c0_10 = arith.constant 0 : index
      %c0_11 = arith.constant 0 : index
      %12 = vector.load %arg7[%c0_10, %c0_11] : memref<16x32xf32, #tpu.memory_space<vmem>>, vector<16x32xf32>
      %c0_12 = arith.constant 0 : index
      %c0_13 = arith.constant 0 : index
      %13 = vector.load %arg5[%c0_12, %c0_13] : memref<1x32xf32, #tpu.memory_space<vmem>>, vector<1x32xf32>
      %14 = vector.broadcast %13 : vector<1x32xf32> to vector<16x32xf32>
      %15 = arith.addf %12, %14 : vector<16x32xf32>
      %c0_14 = arith.constant 0 : index
      %c0_15 = arith.constant 0 : index
      %16 = vector.load %arg6[%c0_14, %c0_15] : memref<16x32xf32, #tpu.memory_space<vmem>>, vector<16x32xf32>
      tpu.vector_store %arg6[%c0_14, %c0_15], %15 {strides = array<i32>} : memref<16x32xf32, #tpu.memory_space<vmem>>, vector<16x32xf32>,
    } else {
    }
    return
  }
  func.func @transform_0(%arg0: i32, %arg1: i32, %arg2: i32) -> (i32, i32) {
    %c0_i32 = arith.constant 0 : i32
    return %arg0, %arg2 : i32, i32
  }
  func.func @transform_1(%arg0: i32, %arg1: i32, %arg2: i32) -> (i32, i32) {
    %c0_i32 = arith.constant 0 : i32
    return %arg2, %arg1 : i32, i32
  }
  func.func @transform_2(%arg0: i32, %arg1: i32, %arg2: i32) -> (i32, i32) {
    %c0_i32 = arith.constant 0 : i32
    %c0_i32_0 = arith.constant 0 : i32
    return %c0_i32, %arg1 : i32, i32
  }
  func.func @transform_3(%arg0: i32, %arg1: i32, %arg2: i32) -> (i32, i32) {
    %c0_i32 = arith.constant 0 : i32
    return %arg0, %arg1 : i32, i32
  }
}

</mosaic_0001>

<llo_original>
// kernel: tpu_custom_call.1
$region0: #{tpu_custom_call.1}
  #allocation0 [shape = 'u32[]', space=smem, size = 0x4, offset = 0x4, fixed_abs, tag = 'smem constant byte address 0x4 - core index']
  #allocation1 [shape = 'u32[144,128]{1,0:T(1,128)}', space=vmem, size = 0x12000, scoped, tag = 'internal scratch']
  #allocation2 [shape = 'f32[16,32]{1,0:T(8,128)}', space=vmem, size = 0x2000, scoped, tag = 'scratch operand']
  %s0 = inlined_call_operand.hbm [shape: f32[16,32], index: 0, kind: input, shape index: {}]
  %s1 = inlined_call_operand.hbm [shape: f32[32,32], index: 1, kind: input, shape index: {}]
  %s2 = inlined_call_operand.vmem [shape: f32[1,32], index: 2, kind: input, shape index: {}]
  %s3 = inlined_call_operand.hbm [shape: f32[16,32], index: 3, kind: output, shape index: {}]
  %s4 = sld [smem:[#allocation0]]
  $region38: #{tpu_custom_call.1} parent=0
    _
  %s6 = ssub.s32 1, %s4
  %s7 = scalar_select 0, %s6, %s4
  $region1: #{tpu_custom_call.1} parent=0
    #allocation3 [shape = 'u8[8192]{0}', space=vmem, size = 0x2000, scoped, tag = 'input window, operand 0, single buffered']
    #allocation4 [shape = 's32[1]{0}', space=sflag, size = 0x4, scoped, tag = 'scoped memory for tpu_custom_call.1']
    #allocation5 [shape = 's32[1]{0}', space=sflag, size = 0x4, scoped, tag = 'scoped memory for tpu_custom_call.1']
    #allocation6 [shape = 'u8[16384]{0}', space=vmem, size = 0x4000, scoped, tag = 'input window, operand 1, single buffered']
    #allocation7 [shape = 's32[1]{0}', space=sflag, size = 0x4, scoped, tag = 'scoped memory for tpu_custom_call.1']
    #allocation8 [shape = 'u8[8192]{0}', space=vmem, size = 0x2000, scoped, tag = 'output window, operand 0, single buffered']
    %8 = vsyncpa [#allocation4], 0
    %9 = vsyncpa [#allocation7], 0
    %10 = vsyncpa [#allocation5], 0
    // Predicated region
    $region2: #{tpu_custom_call.1} parent=1 // pred_check
      _
    $region3: #{tpu_custom_call.1} parent=1 // pred_check_branch
      %12 = sbr.rel (0) target = $region5
    $region4: #{tpu_custom_call.1} parent=1 // pred_region
      %s14 = ssub.s32 256, 256
      %15 = vsyncadd [#allocation4], %s14
      %s16 = sshll.u32 [#allocation3], 4
      %s17 = int_to_ptr.vmem [resolvable:$true] %s16
      %22 = dma.hbm_to_vmem [thread:$0]  %s0, 256, %s17, [#allocation4], 128, 128, 8
    $region5: #{tpu_custom_call.1} parent=1 // pred_fallthru
      _
    // Predicated region
    $region6: #{tpu_custom_call.1} parent=1 // pred_check
      _
    $region7: #{tpu_custom_call.1} parent=1 // pred_check_branch
      %24 = sbr.rel (0) target = $region9
    $region8: #{tpu_custom_call.1} parent=1 // pred_region
      %s26 = ssub.s32 512, 512
      %27 = vsyncadd [#allocation7], %s26
      %s28 = sshll.u32 [#allocation6], 4
      %s29 = int_to_ptr.vmem [resolvable:$true] %s28
      %34 = dma.hbm_to_vmem [thread:$0]  %s1, 512, %s29, [#allocation7], 128, 128, 8
    $region9: #{tpu_custom_call.1} parent=1 // pred_fallthru
      _
    // Predicated region
    $region10: #{tpu_custom_call.1} parent=1 // pred_check
      _
    $region11: #{tpu_custom_call.1} parent=1 // pred_check_branch
      %36 = sbr.rel (0) target = $region13
    $region12: #{tpu_custom_call.1} parent=1 // pred_region
      _
    $region13: #{tpu_custom_call.1} parent=1 // pred_fallthru
      _
    // Predicated region
    $region14: #{tpu_custom_call.1} parent=1 // pred_check
      _
    $region15: #{tpu_custom_call.1} parent=1 // pred_check_branch
      %38 = sbr.rel (0) target = $region17
    $region16: #{tpu_custom_call.1} parent=1 // pred_region
      %39 = dma.done [#allocation4], 256
    $region17: #{tpu_custom_call.1} parent=1 // pred_fallthru
      _
    // Predicated region
    $region18: #{tpu_custom_call.1} parent=1 // pred_check
      _
    $region19: #{tpu_custom_call.1} parent=1 // pred_check_branch
      %41 = sbr.rel (0) target = $region21
    $region20: #{tpu_custom_call.1} parent=1 // pred_region
      %42 = dma.done [#allocation7], 512
    $region21: #{tpu_custom_call.1} parent=1 // pred_fallthru
      _
    %p43 = scmp.eq.s32.totalorder 0, 0
    // Predicated region
    $region22: #{tpu_custom_call.1} parent=1 // pred_check
      %p44 = pneg %p43
    $region23: #{tpu_custom_call.1} parent=1 // pred_check_branch
      %46 = sbr.rel (%p44) target = $region25
    $region24: #{tpu_custom_call.1} parent=1 // pred_region
      %vm47 = vcmask 261120
      %48 = vst.msk [vmem:[#allocation2] sm:$0xff] %vm47, 0.0
      %49 = vst.msk [vmem:[#allocation2 + $0x8] sm:$0xff] %vm47, 0.0
    $region25: #{tpu_custom_call.1} parent=1 // pred_fallthru
      _
    %v50 = vld [vmem:[#allocation2] sm:$0xff]
    %v51 = vld [vmem:[#allocation2 + $0x8] sm:$0xff]
    %v52 = vld [vmem:[#allocation3] sm:$0xff]
    %v53 = vld [vmem:[#allocation3 + $0x8] sm:$0xff]
    %v54 = vld [vmem:[#allocation6] sm:$0xff]
    %v55 = vld [vmem:[#allocation6 + $0x8] sm:$0xff]
    %v56 = vld [vmem:[#allocation6 + $0x10] sm:$0xff]
    %v57 = vld [vmem:[#allocation6 + $0x18] sm:$0xff]
    %vm58 = vcmask 261120
    %v60 = vsel %vm58, %v52, 0
    %v63 = vsel %vm58, %v53, 0
    %65 = vmatprep.subr.mxu0 0.0
    %66 = vmatpush1.msra.mxu0 %v54
    %67 = vmatprep.subr.mxu0 0.0
    %68 = vmatpush1.msra.mxu0 %v55
    %69 = vmatprep.subr.mxu0 0.0
    %70 = vmatpush1.msra.mxu0 %v56
    %71 = vmatprep.subr.mxu0 0.0
    %72 = vmatpush1.msra.mxu0 %v57
    %73 = vmatprep.subr.mxu0 0.0
    %74 = vmatpush1.msra.mxu0 0.0
    %75 = vmatprep.subr.mxu0 0.0
    %76 = vmatpush1.msra.mxu0 0.0
    %77 = vmatprep.subr.mxu0 0.0
    %78 = vmatpush1.msra.mxu0 0.0
    %79 = vmatprep.subr.mxu0 0.0
    %80 = vmatpush1.msra.mxu0 0.0
    %81 = vmatprep.subr.mxu0 0.0
    %82 = vmatpush1.msra.mxu0 0.0
    %83 = vmatprep.subr.mxu0 0.0
    %84 = vmatpush1.msra.mxu0 0.0
    %85 = vmatprep.subr.mxu0 0.0
    %86 = vmatpush1.msra.mxu0 0.0
    %87 = vmatprep.subr.mxu0 0.0
    %88 = vmatpush1.msra.mxu0 0.0
    %89 = vmatprep.subr.mxu0 0.0
    %90 = vmatpush1.msra.mxu0 0.0
    %91 = vmatprep.subr.mxu0 0.0
    %92 = vmatpush1.msra.mxu0 0.0
    %93 = vmatprep.subr.mxu0 0.0
    %94 = vmatpush1.msra.mxu0 0.0
    %95 = vmatprep.subr.mxu0 0.0
    %96 = vmatpush1.msra.mxu0 0.0
    %97 = vmatprep.subr.mxu0 0.0
    %98 = vmatpush1.msra.mxu0 0.0
    %99 = vmatprep.subr.mxu0 0.0
    %100 = vmatpush1.msra.mxu0 0.0
    %101 = vmatprep.subr.mxu0 0.0
    %102 = vmatpush1.msra.mxu0 0.0
    %103 = vmatprep.subr.mxu0 0.0
    %104 = vmatpush1.msra.mxu0 0.0
    %105 = vmatprep.subr.mxu0 0.0
    %106 = vmatpush1.msra.mxu0 0.0
    %107 = vmatprep.subr.mxu0 0.0
    %108 = vmatpush1.msra.mxu0 0.0
    %109 = vmatprep.subr.mxu0 0.0
    %110 = vmatpush1.msra.mxu0 0.0
    %111 = vmatprep.subr.mxu0 0.0
    %112 = vmatpush1.msra.mxu0 0.0
    %113 = vmatprep.subr.mxu0 0.0
    %114 = vmatpush1.msra.mxu0 0.0
    %115 = vmatprep.subr.mxu0 0.0
    %116 = vmatpush1.msra.mxu0 0.0
    %117 = vmatprep.subr.mxu0 0.0
    %118 = vmatpush1.msra.mxu0 0.0
    %119 = vmatprep.subr.mxu0 0.0
    %120 = vmatpush1.msra.mxu0 0.0
    %121 = vmatprep.subr.mxu0 0.0
    %122 = vmatpush1.msra.mxu0 0.0
    %123 = vmatprep.subr.mxu0 0.0
    %124 = vmatpush1.msra.mxu0 0.0
    %125 = vmatprep.subr.mxu0 0.0
    %126 = vmatpush1.msra.mxu0 0.0
    %127 = vmatprep.subr.mxu0 0.0
    %128 = vmatpush1.msra.mxu0 0.0
    %129 = vmatprep.mubr.f32.mxu0 0.0
    %130 = vmatmul.mubr.f32.gmra.mrb[0].mxu0 %v60
    %v131 = vpop.f32.mrb[0].mxu0
    %v132 = vadd.f32 0.0, %v131
    %v133 = vpop.f32.mrb[0].mxu0
    %134 = vmatprep.mubr.f32.mxu0 0.0
    %135 = vmatmul.mubr.f32.gmra.mrb[0].mxu0 %v63
    %v136 = vpop.f32.mrb[0].mxu0
    %v137 = vadd.f32 0.0, %v136
    %v138 = vpop.f32.mrb[0].mxu0
    %139 = vdwg.mxu0
    %v140 = vadd.f32 %v50, %v132
    %v141 = vadd.f32 %v51, %v137
    %142 = vst.msk [vmem:[#allocation2] sm:$0xff] %vm58, %v140
    %143 = vst.msk [vmem:[#allocation2 + $0x8] sm:$0xff] %vm58, %v141
    // Predicated region
    $region26: #{tpu_custom_call.1} parent=1 // pred_check
      %p144 = pneg %p43
    $region27: #{tpu_custom_call.1} parent=1 // pred_check_branch
      %146 = sbr.rel (%p144) target = $region29
    $region28: #{tpu_custom_call.1} parent=1 // pred_region
      %v147 = vld [vmem:[#allocation2] sm:$0xff]
      %v148 = vld [vmem:[#allocation2 + $0x8] sm:$0xff]
      %v149 = vld [vmem:[%s2] sm:$0x1]
      %v151 = vlaneseq
      %v152 = vshrl.u32 %v151, 7
      %v153 = vsub.s32 0, %v152
      %v154 = vrot.slane %v149, %v153
      %v156 = vadd.f32 %v147, %v154
      %v157 = vadd.f32 %v148, %v154
      %158 = vst.msk [vmem:[#allocation8] sm:$0xff] %vm58, %v156
      %159 = vst.msk [vmem:[#allocation8 + $0x8] sm:$0xff] %vm58, %v157
    $region29: #{tpu_custom_call.1} parent=1 // pred_fallthru
      _
    // Predicated region
    $region30: #{tpu_custom_call.1} parent=1 // pred_check
      _
    $region31: #{tpu_custom_call.1} parent=1 // pred_check_branch
      %161 = sbr.rel (0) target = $region33
    $region32: #{tpu_custom_call.1} parent=1 // pred_region
      %s163 = ssub.s32 256, 256
      %164 = vsyncadd [#allocation5], %s163
      %s165 = sshll.u32 [#allocation8], 4
      %s166 = int_to_ptr.vmem [resolvable:$true] %s165
      %171 = dma.vmem_to_hbm [thread:$0]  %s166, 256, %s3, [#allocation5], 128, 128, 8
    $region33: #{tpu_custom_call.1} parent=1 // pred_fallthru
      _
    // Predicated region
    $region34: #{tpu_custom_call.1} parent=1 // pred_check
      _
    $region35: #{tpu_custom_call.1} parent=1 // pred_check_branch
      %173 = sbr.rel (0) target = $region37
    $region36: #{tpu_custom_call.1} parent=1 // pred_region
      %174 = dma.done [#allocation5], 256
    $region37: #{tpu_custom_call.1} parent=1 // pred_fallthru
      _
    %175 = vsyncpa [#allocation4], 1
    %176 = vsyncpa [#allocation7], 1
    %177 = vsyncpa [#allocation5], 1

</llo_original>
